<compile_context>
chip_gen: v5e
topology: v5e:2x2
jax: 0.10.0
libtpu: 0.0.40
codegen_flags: <defaults>
</compile_context>

<pallas_src>
import functools

import jax
import jax.numpy as jnp
from jax.experimental import pallas as pl
from jax.experimental.pallas import tpu as pltpu

_LANE = 128
_SUBLANE = 8


def _round_up(x, m):
    return ((x + m - 1) // m) * m


def _policy_kernel(x_ref, w1_ref, b1_ref, w2_ref, b2_ref, mean_ref):
    # fc1: (TB, S) @ (S, Hp) + (1, Hp), then ReLU.
    h = jnp.dot(x_ref[...], w1_ref[...], preferred_element_type=jnp.float32)
    h = jnp.maximum(h + b1_ref[...], 0.0)
    # fc2_mean: (TB, Hp) @ (Hp, A) + (1, A); narrow (A-wide) masked store.
    mean = jnp.dot(h, w2_ref[...], preferred_element_type=jnp.float32)
    mean_ref[...] = (mean + b2_ref[...]).astype(mean_ref.dtype)


@functools.partial(jax.jit, static_argnames=("block_b",))
def _policy_forward_impl(x, w1, b1, w2, b2, block_b):
    B, S = x.shape
    H, A = w2.shape

    # Zero-pad hidden dim to the lane width (64 -> 128). Exact: the padded
    # h-columns are relu(x@0 + 0) = 0 and the matching w2 rows are 0.
    Hp = _round_up(max(H, _LANE), _LANE)
    w1p = jnp.zeros((S, Hp), jnp.float32).at[:, :H].set(w1.astype(jnp.float32))
    b1p = jnp.zeros((1, Hp), jnp.float32).at[:, :H].set(
        b1.reshape(1, H).astype(jnp.float32))
    w2p = jnp.zeros((Hp, A), jnp.float32).at[:H, :].set(w2.astype(jnp.float32))
    b2p = b2.reshape(1, A).astype(jnp.float32)

    # Batch tile: multiple of 8 (sublane), capped at block_b, and chosen so the
    # grid has >= 2 steps whenever B > 8 (so v7x's two TCs both get tiles).
    block_b = max(_SUBLANE, _round_up(block_b, _SUBLANE))
    if B <= _SUBLANE:
        TB = _SUBLANE
    else:
        TB = min(block_b, _round_up((B + 1) // 2, _SUBLANE))
    grid = (pl.cdiv(B, TB),)

    flops = 2 * B * (S * Hp + Hp * A)
    bytes_accessed = 4 * (B * S + S * Hp + Hp + Hp * A + A + B * A)

    action_mean = pl.pallas_call(
        _policy_kernel,
        out_shape=jax.ShapeDtypeStruct((B, A), jnp.float32),
        grid_spec=pltpu.PrefetchScalarGridSpec(
            num_scalar_prefetch=0,
            grid=grid,
            in_specs=[
                # Activations: tiled along batch, pipelined; partial last
                # tile is handled by Pallas' boundary masking.
                pl.BlockSpec((TB, S), lambda i: (i, 0)),
                # Weights / biases: constant index_map -> VMEM-resident.
                pl.BlockSpec((S, Hp), lambda i: (0, 0)),
                pl.BlockSpec((1, Hp), lambda i: (0, 0)),
                pl.BlockSpec((Hp, A), lambda i: (0, 0)),
                pl.BlockSpec((1, A), lambda i: (0, 0)),
            ],
            out_specs=pl.BlockSpec((TB, A), lambda i: (i, 0)),
        ),
        compiler_params=pltpu.CompilerParams(
            dimension_semantics=("parallel",),  # shard batch tiles across TCs (v7x)
        ),
        cost_estimate=pl.CostEstimate(
            flops=flops, transcendentals=0, bytes_accessed=bytes_accessed
        ),
    )(x.astype(jnp.float32), w1p, b1p, w2p, b2p)

    return action_mean


def policy_forward(x, w1, b1, w2, b2, sigma=5.0, block_b=4096):
    """Batched Policy forward in a single Pallas kernel.

    x: (B, state_space). Batch B may be any size (fuse many env steps /
    rollout timesteps into one call — that is where the real speedup lives).

    Returns (action_mean, sigma) — the parameters of the Normal action
    distribution that the PyTorch module returns.
    """
    action_mean = _policy_forward_impl(x, w1, b1, w2, b2, block_b)
    # TODO(synk): torch.distributions.Normal object itself has no Pallas
    # equivalent; we return its parameters (mean, sigma) instead.
    return action_mean, jnp.float32(sigma)


def init_policy_params(key, state_space, action_space, hidden=64):
    """Deterministic init matching Policy.init_weights:
       weights ~ Normal(0, 1), biases = 0."""
    k1, k2 = jax.random.split(key)
    # Stored as (in, out) — transpose of PyTorch's (out, in).
    w1 = jax.random.normal(k1, (state_space, hidden), dtype=jnp.float32)
    b1 = jnp.zeros((1, hidden), dtype=jnp.float32)
    w2 = jax.random.normal(k2, (hidden, action_space), dtype=jnp.float32)
    b2 = jnp.zeros((1, action_space), dtype=jnp.float32)
    return w1, b1, w2, b2


if __name__ == "__main__":
    state_space = 16
    action_space = 4
    hidden = 64

    key = jax.random.PRNGKey(0)
    kx, kx2, kp = jax.random.split(key, 3)
    w1, b1, w2, b2 = init_policy_params(kp, state_space, action_space, hidden)

    episode_number = 0  # unused in forward, kept for signature parity

    def ref_forward(x):
        return jnp.maximum(x @ w1 + b1, 0.0) @ w2 + b2

    # --- Check 1: small batch (single grid step, exact tile) ---
    batch = 8
    x = jax.random.normal(kx, (batch, state_space), dtype=jnp.float32)
    action_mean, sigma = policy_forward(x, w1, b1, w2, b2, sigma=5.0)
    action_mean = jax.block_until_ready(action_mean)
    assert action_mean.shape == (batch, action_space)
    assert jnp.allclose(action_mean, ref_forward(x), atol=1e-4, rtol=1e-4)
    assert float(sigma) == 5.0

    # --- Check 2: batched rollout, multi-tile grid + masked partial last tile ---
    batch2 = 300  # not a multiple of the tile -> exercises boundary masking
    x2 = jax.random.normal(kx2, (batch2, state_space), dtype=jnp.float32)
    action_mean2, _ = policy_forward(x2, w1, b1, w2, b2, sigma=5.0)
    action_mean2 = jax.block_until_ready(action_mean2)
    assert action_mean2.shape == (batch2, action_space)
    assert jnp.allclose(action_mean2, ref_forward(x2), atol=1e-4, rtol=1e-4)

    # --- Check 3: small explicit block_b forces several grid steps ---
    action_mean3, _ = policy_forward(x2, w1, b1, w2, b2, sigma=5.0, block_b=64)
    action_mean3 = jax.block_until_ready(action_mean3)
    assert jnp.allclose(action_mean3, ref_forward(x2), atol=1e-4, rtol=1e-4)

    print("KERNEL_OK")
</pallas_src>

<mosaic_0001>
module attributes {stable_mosaic.version = 11 : i64} {
  func.func @_policy_kernel(%arg0: i32, %arg1: memref<8x16xf32, #tpu.memory_space<vmem>>, %arg2: memref<16x128xf32, #tpu.memory_space<vmem>>, %arg3: memref<1x128xf32, #tpu.memory_space<vmem>>, %arg4: memref<128x4xf32, #tpu.memory_space<vmem>>, %arg5: memref<1x4xf32, #tpu.memory_space<vmem>>, %arg6: memref<8x4xf32, #tpu.memory_space<vmem>>) attributes {dimension_semantics = [#tpu.dimension_semantics<parallel>], iteration_bounds = array<i64: 1>, scalar_prefetch = 0 : i64, scratch_operands = 0 : i64, tpu.core_type = #tpu.core_type<tc>, window_params = [{transform_indices = @transform_0, window_bounds = array<i64: 8, 16>}, {pipeline_mode = #tpu.pipeline_mode<synchronous>, transform_indices = @transform_1, window_bounds = array<i64: 16, 128>}, {pipeline_mode = #tpu.pipeline_mode<synchronous>, transform_indices = @transform_2, window_bounds = array<i64: 1, 128>}, {pipeline_mode = #tpu.pipeline_mode<synchronous>, transform_indices = @transform_3, window_bounds = array<i64: 128, 4>}, {pipeline_mode = #tpu.pipeline_mode<synchronous>, transform_indices = @transform_4, window_bounds = array<i64: 1, 4>}, {transform_indices = @transform_5, window_bounds = array<i64: 8, 4>}]} {
    %c0 = arith.constant 0 : index
    %c0_0 = arith.constant 0 : index
    %0 = vector.load %arg1[%c0, %c0_0] : memref<8x16xf32, #tpu.memory_space<vmem>>, vector<8x16xf32>
    %c0_1 = arith.constant 0 : index
    %c0_2 = arith.constant 0 : index
    %1 = vector.load %arg2[%c0_1, %c0_2] : memref<16x128xf32, #tpu.memory_space<vmem>>, vector<16x128xf32>
    %cst = arith.constant dense<0.000000e+00> : vector<8x128xf32>
    %2 = tpu.matmul %0, %1, %cst {dimension_numbers = #tpu.dot_dimension_numbers<[1], [0], [0], [1], [0, 0, 1, 1], [], []>} : vector<8x16xf32>, vector<16x128xf32>, vector<8x128xf32> -> vector<8x128xf32>
    %c0_3 = arith.constant 0 : index
    %c0_4 = arith.constant 0 : index
    %3 = vector.load %arg3[%c0_3, %c0_4] : memref<1x128xf32, #tpu.memory_space<vmem>>, vector<1x128xf32>
    %4 = vector.broadcast %3 : vector<1x128xf32> to vector<8x128xf32>
    %5 = arith.addf %2, %4 : vector<8x128xf32>
    %cst_5 = arith.constant 0.000000e+00 : f32
    %6 = vector.broadcast %cst_5 : f32 to vector<8x128xf32>
    %7 = arith.maximumf %5, %6 : vector<8x128xf32>
    %c0_6 = arith.constant 0 : index
    %c0_7 = arith.constant 0 : index
    %8 = vector.load %arg4[%c0_6, %c0_7] : memref<128x4xf32, #tpu.memory_space<vmem>>, vector<128x4xf32>
    %cst_8 = arith.constant dense<0.000000e+00> : vector<8x4xf32>
    %9 = tpu.matmul %7, %8, %cst_8 {dimension_numbers = #tpu.dot_dimension_numbers<[1], [0], [0], [1], [0, 0, 1, 1], [], []>} : vector<8x128xf32>, vector<128x4xf32>, vector<8x4xf32> -> vector<8x4xf32>
    %c0_9 = arith.constant 0 : index
    %c0_10 = arith.constant 0 : index
    %10 = vector.load %arg5[%c0_9, %c0_10] : memref<1x4xf32, #tpu.memory_space<vmem>>, vector<1x4xf32>
    %11 = vector.broadcast %10 : vector<1x4xf32> to vector<8x4xf32>
    %12 = arith.addf %9, %11 : vector<8x4xf32>
    %c0_11 = arith.constant 0 : index
    %c0_12 = arith.constant 0 : index
    %13 = vector.load %arg6[%c0_11, %c0_12] : memref<8x4xf32, #tpu.memory_space<vmem>>, vector<8x4xf32>
    tpu.vector_store %arg6[%c0_11, %c0_12], %12 {strides = array<i32>} : memref<8x4xf32, #tpu.memory_space<vmem>>, vector<8x4xf32>,
    return
  }
  func.func @transform_0(%arg0: i32) -> (i32, i32) {
    %c0_i32 = arith.constant 0 : i32
    %c0_i32_0 = arith.constant 0 : i32
    return %arg0, %c0_i32 : i32, i32
  }
  func.func @transform_1(%arg0: i32) -> (i32, i32) {
    %c0_i32 = arith.constant 0 : i32
    %c0_i32_0 = arith.constant 0 : i32
    %c0_i32_1 = arith.constant 0 : i32
    return %c0_i32, %c0_i32_0 : i32, i32
  }
  func.func @transform_2(%arg0: i32) -> (i32, i32) {
    %c0_i32 = arith.constant 0 : i32
    %c0_i32_0 = arith.constant 0 : i32
    %c0_i32_1 = arith.constant 0 : i32
    return %c0_i32, %c0_i32_0 : i32, i32
  }
  func.func @transform_3(%arg0: i32) -> (i32, i32) {
    %c0_i32 = arith.constant 0 : i32
    %c0_i32_0 = arith.constant 0 : i32
    %c0_i32_1 = arith.constant 0 : i32
    return %c0_i32, %c0_i32_0 : i32, i32
  }
  func.func @transform_4(%arg0: i32) -> (i32, i32) {
    %c0_i32 = arith.constant 0 : i32
    %c0_i32_0 = arith.constant 0 : i32
    %c0_i32_1 = arith.constant 0 : i32
    return %c0_i32, %c0_i32_0 : i32, i32
  }
  func.func @transform_5(%arg0: i32) -> (i32, i32) {
    %c0_i32 = arith.constant 0 : i32
    %c0_i32_0 = arith.constant 0 : i32
    return %arg0, %c0_i32 : i32, i32
  }
}

</mosaic_0001>

<llo_original>
// kernel: _policy_forward_impl.1
$region0: #{_policy_forward_impl.1}
  #allocation0 [shape = 'u32[]', space=smem, size = 0x4, offset = 0x4, fixed_abs, tag = 'smem constant byte address 0x4 - core index']
  #allocation1 [shape = 'u32[72,128]{1,0:T(1,128)}', space=vmem, size = 0x9000, scoped, tag = 'internal scratch']
  %s0 = inlined_call_operand.vmem [shape: f32[8,16], index: 0, kind: input, shape index: {}]
  %s1 = inlined_call_operand.vmem [shape: f32[16,128], index: 1, kind: input, shape index: {}]
  %s2 = inlined_call_operand.vmem [shape: f32[1,128], index: 2, kind: input, shape index: {}]
  %s3 = inlined_call_operand.vmem [shape: f32[128,4], index: 3, kind: input, shape index: {}]
  %s4 = inlined_call_operand.vmem [shape: f32[1,4], index: 4, kind: input, shape index: {}]
  %s5 = inlined_call_operand.vmem [shape: f32[8,4], index: 5, kind: output, shape index: {}]
  %s6 = sld [smem:[#allocation0]]
  $region30: #{_policy_forward_impl.1} parent=0
    _
  %s8 = ssub.s32 1, %s6
  %s9 = scalar_select 0, %s8, %s6
  // Predicated region
  $region2: #{_policy_forward_impl.1} parent=0 // pred_check
    _
  $region3: #{_policy_forward_impl.1} parent=0 // pred_check_branch
    %11 = sbr.rel (0) target = $region5
  $region4: #{_policy_forward_impl.1} parent=0 // pred_region
    _
  $region5: #{_policy_forward_impl.1} parent=0 // pred_fallthru
    _
  // Predicated region
  $region6: #{_policy_forward_impl.1} parent=0 // pred_check
    _
  $region7: #{_policy_forward_impl.1} parent=0 // pred_check_branch
    %13 = sbr.rel (0) target = $region9
  $region8: #{_policy_forward_impl.1} parent=0 // pred_region
    _
  $region9: #{_policy_forward_impl.1} parent=0 // pred_fallthru
    _
  // Predicated region
  $region10: #{_policy_forward_impl.1} parent=0 // pred_check
    _
  $region11: #{_policy_forward_impl.1} parent=0 // pred_check_branch
    %15 = sbr.rel (0) target = $region13
  $region12: #{_policy_forward_impl.1} parent=0 // pred_region
    _
  $region13: #{_policy_forward_impl.1} parent=0 // pred_fallthru
    _
  // Predicated region
  $region14: #{_policy_forward_impl.1} parent=0 // pred_check
    _
  $region15: #{_policy_forward_impl.1} parent=0 // pred_check_branch
    %17 = sbr.rel (0) target = $region17
  $region16: #{_policy_forward_impl.1} parent=0 // pred_region
    _
  $region17: #{_policy_forward_impl.1} parent=0 // pred_fallthru
    _
  // Predicated region
  $region18: #{_policy_forward_impl.1} parent=0 // pred_check
    _
  $region19: #{_policy_forward_impl.1} parent=0 // pred_check_branch
    %19 = sbr.rel (0) target = $region21
  $region20: #{_policy_forward_impl.1} parent=0 // pred_region
    _
  $region21: #{_policy_forward_impl.1} parent=0 // pred_fallthru
    _
  %v20 = vld [vmem:[%s0] sm:$0xff]
  %v21 = vld [vmem:[%s1] sm:$0xff]
  %v22 = vld [vmem:[%s1 + $0x8] sm:$0xff]
  %v23 = vld [vmem:[%s2] sm:$0x1]
  %v25 = vperm.slane %v23, 0
  %vm27 = vcmask 130048
  %v29 = vsel %vm27, %v20, 0
  %31 = vmatpush.msra.mxu0 0.0
  %32 = vmatpush.msra.mxu0 0.0
  %33 = vmatpush.msra.mxu0 0.0
  %34 = vmatpush.msra.mxu0 0.0
  %35 = vmatpush.msra.mxu0 0.0
  %36 = vmatpush.msra.mxu0 0.0
  %37 = vmatpush.msra.mxu0 0.0
  %38 = vmatpush.msra.mxu0 0.0
  %39 = vmatpush.msra.mxu0 0.0
  %40 = vmatpush.msra.mxu0 0.0
  %41 = vmatpush.msra.mxu0 0.0
  %42 = vmatpush.msra.mxu0 0.0
  %43 = vmatpush.msra.mxu0 0.0
  %44 = vmatpush.msra.mxu0 0.0
  %45 = vmatpush.msra.mxu0 %v22
  %46 = vmatpush.msra.mxu0 %v21
  %47 = vmatmul.f32.gmra.mxu0 %v29
  %v48 = vpop.f32.mrf.mxu0
  %v49 = vadd.f32 %v25, %v48
  %50 = vdwg.mxu0
  %v51 = vmax.f32 %v49, 0.0
  %v52 = vld [vmem:[%s3] sm:$0xff]
  %v53 = vld [vmem:[%s3 + $0x8] sm:$0xff]
  %v54 = vld [vmem:[%s3 + $0x10] sm:$0xff]
  %v55 = vld [vmem:[%s3 + $0x18] sm:$0xff]
  %v56 = vld [vmem:[%s3 + $0x20] sm:$0xff]
  %v57 = vld [vmem:[%s3 + $0x28] sm:$0xff]
  %v58 = vld [vmem:[%s3 + $0x30] sm:$0xff]
  %v59 = vld [vmem:[%s3 + $0x38] sm:$0xff]
  %v60 = vld [vmem:[%s3 + $0x40] sm:$0xff]
  %v61 = vld [vmem:[%s3 + $0x48] sm:$0xff]
  %v62 = vld [vmem:[%s3 + $0x50] sm:$0xff]
  %v63 = vld [vmem:[%s3 + $0x58] sm:$0xff]
  %v64 = vld [vmem:[%s3 + $0x60] sm:$0xff]
  %v65 = vld [vmem:[%s3 + $0x68] sm:$0xff]
  %v66 = vld [vmem:[%s3 + $0x70] sm:$0xff]
  %v67 = vld [vmem:[%s3 + $0x78] sm:$0xff]
  %v68 = vld [vmem:[%s4] sm:$0x1]
  %v70 = vperm.slane %v68, 0
  %72 = vmatpush.msra.mxu0 %v67
  %73 = vmatpush.msra.mxu0 %v66
  %74 = vmatpush.msra.mxu0 %v65
  %75 = vmatpush.msra.mxu0 %v64
  %76 = vmatpush.msra.mxu0 %v63
  %77 = vmatpush.msra.mxu0 %v62
  %78 = vmatpush.msra.mxu0 %v61
  %79 = vmatpush.msra.mxu0 %v60
  %80 = vmatpush.msra.mxu0 %v59
  %81 = vmatpush.msra.mxu0 %v58
  %82 = vmatpush.msra.mxu0 %v57
  %83 = vmatpush.msra.mxu0 %v56
  %84 = vmatpush.msra.mxu0 %v55
  %85 = vmatpush.msra.mxu0 %v54
  %86 = vmatpush.msra.mxu0 %v53
  %87 = vmatpush.msra.mxu0 %v52
  %88 = vmatmul.f32.gmra.mxu0 %v51
  %v89 = vpop.f32.mrf.mxu0
  %v90 = vadd.f32 %v70, %v89
  %91 = vdwg.mxu0
  %vm92 = vcmask 31744
  %93 = vst.msk [vmem:[%s5] sm:$0xff] %vm92, %v90
  // Predicated region
  $region22: #{_policy_forward_impl.1} parent=0 // pred_check
    _
  $region23: #{_policy_forward_impl.1} parent=0 // pred_check_branch
    %95 = sbr.rel (0) target = $region25
  $region24: #{_policy_forward_impl.1} parent=0 // pred_region
    _
  $region25: #{_policy_forward_impl.1} parent=0 // pred_fallthru
    _
  // Predicated region
  $region26: #{_policy_forward_impl.1} parent=0 // pred_check
    _
  $region27: #{_policy_forward_impl.1} parent=0 // pred_check_branch
    %97 = sbr.rel (0) target = $region29
  $region28: #{_policy_forward_impl.1} parent=0 // pred_region
    _
  $region29: #{_policy_forward_impl.1} parent=0 // pred_fallthru
    _

</llo_original>
